<compile_context>
chip_gen: v5e
topology: v5e:2x2
jax: 0.10.0
libtpu: 0.0.40
codegen_flags: <defaults>
</compile_context>

<pallas_src>
import functools

import jax
import jax.numpy as jnp
from jax.experimental import pallas as pl
from jax.experimental.pallas import tpu as pltpu


def support_sets_kernel(mask_ref, z_ref, sv_ref, ssq_ref, ablk_ref, out_ref, *,
                        gamma):
    z = z_ref[...].astype(jnp.float32)                      # (tb, D)
    mask = mask_ref[...].astype(jnp.float32)                # (tb, K)
    S = sv_ref[...].astype(jnp.float32)                     # (K*2M, D)

    # Per-row weights with (one-hot) set selection and -2*gamma*alpha folded in:
    #   w_base[b, (k, m)] = mask[b, k] * alpha[k, m] * (-2*gamma)
    w_base = jnp.dot(mask, ablk_ref[...],
                     preferred_element_type=jnp.float32)    # (tb, K*2M)

    # Squared distances via the MXU: ||z - s||^2 = ||z||^2 - 2 z.s + ||s||^2.
    z_sq = jnp.sum(z * z, axis=1, keepdims=True)            # (tb, 1)
    cross = jnp.einsum('bd,kd->bk', z, S,
                       preferred_element_type=jnp.float32)  # (tb, K*2M)
    sq = z_sq - 2.0 * cross + ssq_ref[...]                  # (tb, K*2M)

    w = w_base * jnp.exp(-gamma * sq)                       # (tb, K*2M)

    # grad_f = sum_km w_km * (z - S_km) = rowsum(w) * z - w @ S.
    grad = (jnp.sum(w, axis=1, keepdims=True) * z
            - jnp.dot(w, S, preferred_element_type=jnp.float32))   # (tb, D)

    norm_sq = jnp.sum(grad * grad, axis=1, keepdims=True)   # (tb, 1)
    out_ref[...] = (grad * jax.lax.rsqrt(norm_sq)).astype(out_ref.dtype)
    # TODO(synk): learn_gammas=True (gammas = exp(mask @ LOGGAMMA)) and
    # learn_alphas=True branches not wired up; default constructor path only.


def support_sets_forward(support_sets_mask, z, support_sets, alphas, *,
                         num_dipoles, gamma, tile_b=None):
    B, D = z.shape
    K, F = support_sets.shape
    n_sv = 2 * num_dipoles
    KM = K * n_sv
    assert F == n_sv * D and alphas.shape == (K, n_sv)
    assert support_sets_mask.shape == (B, K)

    # Flatten all K*2M support vectors and precompute batch-independent
    # constants (tiny, one-time): squared norms and the block-diagonal
    # (-2*gamma)-scaled alphas so `mask @ A_blk` folds the one-hot selection
    # into zero weights inside the kernel.
    # TODO(synk): for soft / multi-hot masks this weights the per-dipole terms
    # instead of mixing support vectors (mask @ SUPPORT_SETS); exact for the
    # one-hot masks the module is used with.
    S = support_sets.reshape(KM, D).astype(jnp.float32)                 # (KM, D)
    s_sq = jnp.sum(S * S, axis=1).reshape(1, KM)                        # (1, KM)
    a_scaled = alphas.astype(jnp.float32) * (-2.0 * float(gamma))       # (K, 2M)
    a_blk = (jnp.eye(K, dtype=jnp.float32)[:, :, None]
             * a_scaled[None, :, :]).reshape(K, KM)                     # (K, KM)

    if tile_b is None:
        tile_b = B
        # Keep >= 2 outer grid steps once B is large enough so both v7x
        # TensorCores get work (neutral on single-TC v5e/v6e).
        max_tile = B // 2 if B >= 16 else B
        for cand in (256, 128, 64, 32, 16, 8):
            if cand <= max_tile and B % cand == 0:
                tile_b = cand
                break
    assert B % tile_b == 0, "batch must be a multiple of tile_b"

    kernel = functools.partial(support_sets_kernel, gamma=float(gamma))

    return pl.pallas_call(
        kernel,
        out_shape=jax.ShapeDtypeStruct((B, D), z.dtype),
        grid_spec=pltpu.PrefetchScalarGridSpec(
            num_scalar_prefetch=0,
            grid=(B // tile_b,),
            in_specs=[
                # Batch-tiled inputs, pipelined across the grid.
                pl.BlockSpec((tile_b, K), lambda i: (i, 0)),
                pl.BlockSpec((tile_b, D), lambda i: (i, 0)),
                # Tiny parameter tables: VMEM-resident (constant block index,
                # fetched once, no per-row gather DMAs).
                pl.BlockSpec((KM, D), lambda i: (0, 0)),
                pl.BlockSpec((1, KM), lambda i: (0, 0)),
                pl.BlockSpec((K, KM), lambda i: (0, 0)),
            ],
            out_specs=pl.BlockSpec((tile_b, D), lambda i: (i, 0)),
        ),
        compiler_params=pltpu.CompilerParams(
            dimension_semantics=("parallel",)),
    )(support_sets_mask, z, S, s_sq, a_blk)


def support_sets_ref(mask, z, support_sets, alphas, num_dipoles, gamma):
    B, D = z.shape
    ssb = (mask @ support_sets).reshape(B, 2 * num_dipoles, D)
    ab = (mask @ alphas)[..., None]
    Dm = z[:, None, :] - ssb
    sq = jnp.sum(Dm * Dm, axis=2, keepdims=True)
    grad_f = -2.0 * jnp.sum(ab * gamma * jnp.exp(-gamma * sq) * Dm, axis=1)
    return grad_f / jnp.linalg.norm(grad_f, axis=1, keepdims=True)


if __name__ == "__main__":
    # Module hyper-parameters (small, consistent with the constructor).
    K = 4          # num_support_sets
    M = 4          # num_support_dipoles  -> 2M = 8 support vectors per set
    D = 128        # support_vectors_dim (latent dim, lane-friendly)
    B = 16         # batch size (tile_b auto -> 8, grid (2,): 2 outer steps)
    gamma = 1.0 / D

    key = jax.random.PRNGKey(0)
    k_sv, k_idx, k_z = jax.random.split(key, 3)

    # --- deterministic parameter init (mirrors the PyTorch __init__) --------
    r_min, r_max = 1.0, 4.0
    radii = jnp.arange(r_min, r_max, (r_max - r_min) / K)            # (K,)
    sv = jax.random.normal(k_sv, (K, M, D), dtype=jnp.float32)       # dipole dirs
    dip = jnp.stack([sv, -sv], axis=2).reshape(K, 2 * M, D)          # [SV, -SV]
    dip = radii[:, None, None] * dip / jnp.linalg.norm(dip, axis=2, keepdims=True)
    SUPPORT_SETS = dip.reshape(K, 2 * M * D).astype(jnp.float32)     # (K, 2M*D)
    ALPHAS = jnp.tile(jnp.array([1.0, -1.0], jnp.float32), (K, M))   # (K, 2M)

    # --- example inputs -----------------------------------------------------
    idx = jax.random.randint(k_idx, (B,), 0, K)
    support_sets_mask = jax.nn.one_hot(idx, K, dtype=jnp.float32)    # (B, K)
    z = jax.random.normal(k_z, (B, D), dtype=jnp.float32)            # (B, D)

    out = support_sets_forward(
        support_sets_mask, z, SUPPORT_SETS, ALPHAS,
        num_dipoles=M, gamma=gamma)
    out = jax.block_until_ready(out)

    ref = support_sets_ref(support_sets_mask, z, SUPPORT_SETS, ALPHAS, M, gamma)
    assert out.shape == (B, D)
    assert jnp.allclose(out, ref, atol=1e-4, rtol=1e-4), "mismatch vs JAX reference"

    print("KERNEL_OK")
</pallas_src>

<mosaic_0001>
module attributes {stable_mosaic.version = 11 : i64} {
  func.func @support_sets_kernel(%arg0: i32, %arg1: memref<8x4xf32, #tpu.memory_space<vmem>>, %arg2: memref<8x128xf32, #tpu.memory_space<vmem>>, %arg3: memref<32x128xf32, #tpu.memory_space<vmem>>, %arg4: memref<1x32xf32, #tpu.memory_space<vmem>>, %arg5: memref<4x32xf32, #tpu.memory_space<vmem>>, %arg6: memref<8x128xf32, #tpu.memory_space<vmem>>) attributes {dimension_semantics = [#tpu.dimension_semantics<parallel>], iteration_bounds = array<i64: 2>, scalar_prefetch = 0 : i64, scratch_operands = 0 : i64, tpu.core_type = #tpu.core_type<tc>, window_params = [{transform_indices = @transform_0, window_bounds = array<i64: 8, 4>}, {transform_indices = @transform_1, window_bounds = array<i64: 8, 128>}, {pipeline_mode = #tpu.pipeline_mode<synchronous>, transform_indices = @transform_2, window_bounds = array<i64: 32, 128>}, {pipeline_mode = #tpu.pipeline_mode<synchronous>, transform_indices = @transform_3, window_bounds = array<i64: 1, 32>}, {pipeline_mode = #tpu.pipeline_mode<synchronous>, transform_indices = @transform_4, window_bounds = array<i64: 4, 32>}, {transform_indices = @transform_5, window_bounds = array<i64: 8, 128>}]} {
    %c0 = arith.constant 0 : index
    %c0_0 = arith.constant 0 : index
    %0 = vector.load %arg2[%c0, %c0_0] : memref<8x128xf32, #tpu.memory_space<vmem>>, vector<8x128xf32>
    %c0_1 = arith.constant 0 : index
    %c0_2 = arith.constant 0 : index
    %1 = vector.load %arg1[%c0_1, %c0_2] : memref<8x4xf32, #tpu.memory_space<vmem>>, vector<8x4xf32>
    %c0_3 = arith.constant 0 : index
    %c0_4 = arith.constant 0 : index
    %2 = vector.load %arg3[%c0_3, %c0_4] : memref<32x128xf32, #tpu.memory_space<vmem>>, vector<32x128xf32>
    %c0_5 = arith.constant 0 : index
    %c0_6 = arith.constant 0 : index
    %3 = vector.load %arg5[%c0_5, %c0_6] : memref<4x32xf32, #tpu.memory_space<vmem>>, vector<4x32xf32>
    %cst = arith.constant dense<0.000000e+00> : vector<8x32xf32>
    %4 = tpu.matmul %1, %3, %cst {dimension_numbers = #tpu.dot_dimension_numbers<[1], [0], [0], [1], [0, 0, 1, 1], [], []>} : vector<8x4xf32>, vector<4x32xf32>, vector<8x32xf32> -> vector<8x32xf32>
    %5 = arith.mulf %0, %0 : vector<8x128xf32>
    %cst_7 = arith.constant dense<0.000000e+00> : vector<8xf32>
    %6 = vector.multi_reduction <add>, %5, %cst_7 [1] : vector<8x128xf32> to vector<8xf32>
    %7 = vector.shape_cast %6 : vector<8xf32> to vector<8x1xf32>
    "tpu.trace_start"() <{level = 10 : i32, message = "bd,kd->bk"}> : () -> ()
    %cst_8 = arith.constant dense<0.000000e+00> : vector<8x32xf32>
    %8 = tpu.matmul %0, %2, %cst_8 {dimension_numbers = #tpu.dot_dimension_numbers<[1], [1], [0], [0], [0, 0, 1, 0], [], []>} : vector<8x128xf32>, vector<32x128xf32>, vector<8x32xf32> -> vector<8x32xf32>
    "tpu.trace_stop"() : () -> ()
    %cst_9 = arith.constant 2.000000e+00 : f32
    %9 = vector.broadcast %cst_9 : f32 to vector<8x32xf32>
    %10 = arith.mulf %9, %8 : vector<8x32xf32>
    %11 = vector.broadcast %7 : vector<8x1xf32> to vector<8x32xf32>
    %12 = arith.subf %11, %10 : vector<8x32xf32>
    %c0_10 = arith.constant 0 : index
    %c0_11 = arith.constant 0 : index
    %13 = vector.load %arg4[%c0_10, %c0_11] : memref<1x32xf32, #tpu.memory_space<vmem>>, vector<1x32xf32>
    %14 = vector.broadcast %13 : vector<1x32xf32> to vector<8x32xf32>
    %15 = arith.addf %12, %14 : vector<8x32xf32>
    %cst_12 = arith.constant -7.812500e-03 : f32
    %16 = vector.broadcast %cst_12 : f32 to vector<8x32xf32>
    %17 = arith.mulf %16, %15 : vector<8x32xf32>
    %18 = math.exp %17 : vector<8x32xf32>
    %19 = arith.mulf %4, %18 : vector<8x32xf32>
    %cst_13 = arith.constant dense<0.000000e+00> : vector<8xf32>
    %20 = vector.multi_reduction <add>, %19, %cst_13 [1] : vector<8x32xf32> to vector<8xf32>
    %21 = vector.shape_cast %20 : vector<8xf32> to vector<8x1xf32>
    %22 = vector.broadcast %21 : vector<8x1xf32> to vector<8x128xf32>
    %23 = arith.mulf %22, %0 : vector<8x128xf32>
    %cst_14 = arith.constant dense<0.000000e+00> : vector<8x128xf32>
    %24 = tpu.matmul %19, %2, %cst_14 {dimension_numbers = #tpu.dot_dimension_numbers<[1], [0], [0], [1], [0, 0, 1, 1], [], []>} : vector<8x32xf32>, vector<32x128xf32>, vector<8x128xf32> -> vector<8x128xf32>
    %25 = arith.subf %23, %24 : vector<8x128xf32>
    %26 = arith.mulf %25, %25 : vector<8x128xf32>
    %cst_15 = arith.constant dense<0.000000e+00> : vector<8xf32>
    %27 = vector.multi_reduction <add>, %26, %cst_15 [1] : vector<8x128xf32> to vector<8xf32>
    %28 = vector.shape_cast %27 : vector<8xf32> to vector<8x1xf32>
    %29 = math.rsqrt %28 : vector<8x1xf32>
    %30 = vector.broadcast %29 : vector<8x1xf32> to vector<8x128xf32>
    %31 = arith.mulf %25, %30 : vector<8x128xf32>
    %c0_16 = arith.constant 0 : index
    %c0_17 = arith.constant 0 : index
    %32 = vector.load %arg6[%c0_16, %c0_17] : memref<8x128xf32, #tpu.memory_space<vmem>>, vector<8x128xf32>
    tpu.vector_store %arg6[%c0_16, %c0_17], %31 {strides = array<i32>} : memref<8x128xf32, #tpu.memory_space<vmem>>, vector<8x128xf32>,
    return
  }
  func.func @transform_0(%arg0: i32) -> (i32, i32) {
    %c0_i32 = arith.constant 0 : i32
    %c0_i32_0 = arith.constant 0 : i32
    return %arg0, %c0_i32 : i32, i32
  }
  func.func @transform_1(%arg0: i32) -> (i32, i32) {
    %c0_i32 = arith.constant 0 : i32
    %c0_i32_0 = arith.constant 0 : i32
    return %arg0, %c0_i32 : i32, i32
  }
  func.func @transform_2(%arg0: i32) -> (i32, i32) {
    %c0_i32 = arith.constant 0 : i32
    %c0_i32_0 = arith.constant 0 : i32
    %c0_i32_1 = arith.constant 0 : i32
    return %c0_i32, %c0_i32_0 : i32, i32
  }
  func.func @transform_3(%arg0: i32) -> (i32, i32) {
    %c0_i32 = arith.constant 0 : i32
    %c0_i32_0 = arith.constant 0 : i32
    %c0_i32_1 = arith.constant 0 : i32
    return %c0_i32, %c0_i32_0 : i32, i32
  }
  func.func @transform_4(%arg0: i32) -> (i32, i32) {
    %c0_i32 = arith.constant 0 : i32
    %c0_i32_0 = arith.constant 0 : i32
    %c0_i32_1 = arith.constant 0 : i32
    return %c0_i32, %c0_i32_0 : i32, i32
  }
  func.func @transform_5(%arg0: i32) -> (i32, i32) {
    %c0_i32 = arith.constant 0 : i32
    %c0_i32_0 = arith.constant 0 : i32
    return %arg0, %c0_i32 : i32, i32
  }
}

</mosaic_0001>

<llo_original>
// kernel: tpu_custom_call.1
$region0: #{tpu_custom_call.1}
  #allocation0 [shape = 'u32[]', space=smem, size = 0x4, offset = 0x4, fixed_abs, tag = 'smem constant byte address 0x4 - core index']
  #allocation1 [shape = 'u32[72,128]{1,0:T(1,128)}', space=vmem, size = 0x9000, scoped, tag = 'internal scratch']
  %s0 = inlined_call_operand.vmem [shape: f32[16,4], index: 0, kind: input, shape index: {}]
  %s1 = inlined_call_operand.vmem [shape: f32[16,128], index: 1, kind: input, shape index: {}]
  %s2 = inlined_call_operand.hbm [shape: f32[32,128], index: 2, kind: input, shape index: {}]
  %s3 = inlined_call_operand.vmem [shape: f32[1,32], index: 3, kind: input, shape index: {}]
  %s4 = inlined_call_operand.vmem [shape: f32[4,32], index: 4, kind: input, shape index: {}]
  %s5 = inlined_call_operand.hbm [shape: f32[16,128], index: 5, kind: output, shape index: {}]
  %s6 = sld [smem:[#allocation0]]
  $region57: #{tpu_custom_call.1} parent=0
    _
  %s8 = ssub.s32 1, %s6
  %s9 = scalar_select 0, %s8, %s6
  $region1: #{tpu_custom_call.1} parent=0
    #allocation2 [shape = 'u8[16384]{0}', space=vmem, size = 0x4000, scoped, tag = 'input window, operand 2, single buffered']
    #allocation3 [shape = 's32[2]{0}', space=sflag, size = 0x8, scoped, tag = 'scoped memory for tpu_custom_call.1']
    #allocation4 [shape = 's32[2]{0}', space=sflag, size = 0x8, scoped, tag = 'scoped memory for tpu_custom_call.1']
    #allocation5 [shape = 'u8[8192]{0}', space=vmem, size = 0x2000, scoped, tag = 'output window, operand 0']
    %10 = vsyncpa [#allocation3], 0
    %11 = vsyncpa [#allocation4], 0
    %s12 = scalar_lea.sflag [#allocation4], 1
    %13 = vsyncpa %s12, 0
    loop: start=0, step=1, limit=4
    $region2: #{tpu_custom_call.1} parent=1 // loop_pre_header
      _
    $region3: #{tpu_custom_call.1} parent=1 // loop_header
      %s15 = sphi 0, %s19
      %p16 = scmp.ge.s32.totalorder %s15, 4
      %s25 = sphi 0, %s27
      %s28 = sphi 0, %s25
      %s29 = sphi 0, %s28
      %s45 = sphi 0, %s29
      %s51 = sphi 0, %s53
      %s54 = sphi 0, %s51
      %s55 = sphi 0, %s54
      %s71 = sphi 0, %s55
      %s75 = sphi 0, %s75
      %s77 = sphi 0, %s75
      %s78 = sphi 0, %s77
      %s92 = sphi 0, %s78
      %s96 = sphi 0, %s96
      %s98 = sphi 0, %s96
      %s99 = sphi 0, %s98
      %s113 = sphi 0, %s99
      %s117 = sphi 0, %s117
      %s119 = sphi 0, %s117
      %s120 = sphi 0, %s119
      %s134 = sphi 0, %s120
      %s140 = sphi 0, %s142
      %s143 = sphi 0, %s140
      %s144 = sphi 0, %s143
      %s160 = sphi 0, %s144
    $region4: #{tpu_custom_call.1} parent=1 // loop_header_branch
      %18 = sbr.rel (%p16) target = $region8
    $region5: #{tpu_custom_call.1} parent=1 // loop_body
      %s20 = ssub.s32 %s15, 1
      %s21 = ssub.s32 %s15, 2
      %s22 = sadd.s32 %s15, 1
      %s23 = ssub.s32 %s15, %s22
      %p24 = scmp.eq.s32.totalorder %s23, 0
      %s26 = sadd.s32 %s25, 1
      %s27 = scalar_select %p24, %s25, %s26
      %p30 = pneg %p24
      %p31 = scmp.eq.s32.totalorder %s15, 1
      %p32 = por %p30, %p31
      %p33 = scmp.ne.s32.totalorder %s25, %s28
      %p34 = scmp.eq.s32.totalorder %s15, 0
      %p35 = por %p33, %p34
      %p36 = scmp.ne.s32.totalorder %s25, %s28
      %p37 = scmp.eq.s32.totalorder %s20, 1
      %p38 = por %p36, %p37
      %p39 = scmp.ne.s32.totalorder %s28, %s29
      %p40 = scmp.eq.s32.totalorder %s20, 0
      %p41 = por %p39, %p40
      %p42 = scmp.ne.s32.totalorder %s28, %s29
      %p43 = scmp.eq.s32.totalorder %s21, 1
      %p44 = por %p42, %p43
      %p46 = scmp.ne.s32.totalorder %s29, %s45
      %p47 = scmp.eq.s32.totalorder %s21, 0
      %p48 = por %p46, %p47
      %s49 = ssub.s32 %s15, %s22
      %p50 = scmp.eq.s32.totalorder %s49, 0
      %s52 = sadd.s32 %s51, 1
      %s53 = scalar_select %p50, %s51, %s52
      %p56 = pneg %p50
      %p57 = scmp.eq.s32.totalorder %s15, 1
      %p58 = por %p56, %p57
      %p59 = scmp.ne.s32.totalorder %s51, %s54
      %p60 = scmp.eq.s32.totalorder %s15, 0
      %p61 = por %p59, %p60
      %p62 = scmp.ne.s32.totalorder %s51, %s54
      %p63 = scmp.eq.s32.totalorder %s20, 1
      %p64 = por %p62, %p63
      %p65 = scmp.ne.s32.totalorder %s54, %s55
      %p66 = scmp.eq.s32.totalorder %s20, 0
      %p67 = por %p65, %p66
      %p68 = scmp.ne.s32.totalorder %s54, %s55
      %p69 = scmp.eq.s32.totalorder %s21, 1
      %p70 = por %p68, %p69
      %p72 = scmp.ne.s32.totalorder %s55, %s71
      %p73 = scmp.eq.s32.totalorder %s21, 0
      %p74 = por %p72, %p73
      %s76 = sadd.s32 %s75, 1
      %p79 = scmp.eq.s32.totalorder %s15, 1
      %p80 = scmp.ne.s32.totalorder %s75, %s77
      %p81 = scmp.eq.s32.totalorder %s15, 0
      %p82 = por %p80, %p81
      %p83 = scmp.ne.s32.totalorder %s75, %s77
      %p84 = scmp.eq.s32.totalorder %s20, 1
      %p85 = por %p83, %p84
      %p86 = scmp.ne.s32.totalorder %s77, %s78
      %p87 = scmp.eq.s32.totalorder %s20, 0
      %p88 = por %p86, %p87
      %p89 = scmp.ne.s32.totalorder %s77, %s78
      %p90 = scmp.eq.s32.totalorder %s21, 1
      %p91 = por %p89, %p90
      %p93 = scmp.ne.s32.totalorder %s78, %s92
      %p94 = scmp.eq.s32.totalorder %s21, 0
      %p95 = por %p93, %p94
      %s97 = sadd.s32 %s96, 1
      %p100 = scmp.eq.s32.totalorder %s15, 1
      %p101 = scmp.ne.s32.totalorder %s96, %s98
      %p102 = scmp.eq.s32.totalorder %s15, 0
      %p103 = por %p101, %p102
      %p104 = scmp.ne.s32.totalorder %s96, %s98
      %p105 = scmp.eq.s32.totalorder %s20, 1
      %p106 = por %p104, %p105
      %p107 = scmp.ne.s32.totalorder %s98, %s99
      %p108 = scmp.eq.s32.totalorder %s20, 0
      %p109 = por %p107, %p108
      %p110 = scmp.ne.s32.totalorder %s98, %s99
      %p111 = scmp.eq.s32.totalorder %s21, 1
      %p112 = por %p110, %p111
      %p114 = scmp.ne.s32.totalorder %s99, %s113
      %p115 = scmp.eq.s32.totalorder %s21, 0
      %p116 = por %p114, %p115
      %s118 = sadd.s32 %s117, 1
      %p121 = scmp.eq.s32.totalorder %s15, 1
      %p122 = scmp.ne.s32.totalorder %s117, %s119
      %p123 = scmp.eq.s32.totalorder %s15, 0
      %p124 = por %p122, %p123
      %p125 = scmp.ne.s32.totalorder %s117, %s119
      %p126 = scmp.eq.s32.totalorder %s20, 1
      %p127 = por %p125, %p126
      %p128 = scmp.ne.s32.totalorder %s119, %s120
      %p129 = scmp.eq.s32.totalorder %s20, 0
      %p130 = por %p128, %p129
      %p131 = scmp.ne.s32.totalorder %s119, %s120
      %p132 = scmp.eq.s32.totalorder %s21, 1
      %p133 = por %p131, %p132
      %p135 = scmp.ne.s32.totalorder %s120, %s134
      %p136 = scmp.eq.s32.totalorder %s21, 0
      %p137 = por %p135, %p136
      %s138 = ssub.s32 %s15, %s22
      %p139 = scmp.eq.s32.totalorder %s138, 0
      %s141 = sadd.s32 %s140, 1
      %s142 = scalar_select %p139, %s140, %s141
      %p145 = pneg %p139
      %p146 = scmp.eq.s32.totalorder %s15, 1
      %p147 = por %p145, %p146
      %p148 = scmp.ne.s32.totalorder %s140, %s143
      %p149 = scmp.eq.s32.totalorder %s15, 0
      %p150 = por %p148, %p149
      %p151 = scmp.ne.s32.totalorder %s140, %s143
      %p152 = scmp.eq.s32.totalorder %s20, 1
      %p153 = por %p151, %p152
      %p154 = scmp.ne.s32.totalorder %s143, %s144
      %p155 = scmp.eq.s32.totalorder %s20, 0
      %p156 = por %p154, %p155
      %p157 = scmp.ne.s32.totalorder %s143, %s144
      %p158 = scmp.eq.s32.totalorder %s21, 1
      %p159 = por %p157, %p158
      %p161 = scmp.ne.s32.totalorder %s144, %s160
      %p162 = scmp.eq.s32.totalorder %s21, 0
      %p163 = por %p161, %p162
      %p164 = scmp.le.s32.totalorder 1, %s15
      %p165 = scmp.lt.s32.totalorder %s15, 3
      %p166 = pnand %p164, %p165
      %p167 = pneg %p166
      // Predicated region
      $region9: #{tpu_custom_call.1} parent=5 // pred_check
        _
      $region10: #{tpu_custom_call.1} parent=5 // pred_check_branch
        %169 = sbr.rel (%p166) target = $region12
      $region11: #{tpu_custom_call.1} parent=5 // pred_region
        %s170 = ssub.s32 %s15, 1
        // Predicated region
        $region13: #{tpu_custom_call.1} parent=11 // pred_check
          %p171 = pneg %p88
        $region14: #{tpu_custom_call.1} parent=11 // pred_check_branch
          %173 = sbr.rel (%p171) target = $region16
        $region15: #{tpu_custom_call.1} parent=11 // pred_region
          %175 = vsyncadd [#allocation3], 0
          %s176 = sshll.u32 %s2, 4
          %s177 = int_to_ptr.hbm [resolvable:$true] %s176
          %s178 = sshll.u32 [#allocation2], 4
          %s179 = int_to_ptr.vmem [resolvable:$true] %s178
          %184 = dma.hbm_to_vmem [thread:$0]  %s177, 512, %s179, [#allocation3], 128, 128, 8
        $region16: #{tpu_custom_call.1} parent=11 // pred_fallthru
          _
        // Predicated region
        $region17: #{tpu_custom_call.1} parent=11 // pred_check
          %p185 = pneg %p109
        $region18: #{tpu_custom_call.1} parent=11 // pred_check_branch
          %187 = sbr.rel (%p185) target = $region20
        $region19: #{tpu_custom_call.1} parent=11 // pred_region
          _
        $region20: #{tpu_custom_call.1} parent=11 // pred_fallthru
          _
        // Predicated region
        $region21: #{tpu_custom_call.1} parent=11 // pred_check
          %p188 = pneg %p130
        $region22: #{tpu_custom_call.1} parent=11 // pred_check_branch
          %190 = sbr.rel (%p188) target = $region24
        $region23: #{tpu_custom_call.1} parent=11 // pred_region
          _
        $region24: #{tpu_custom_call.1} parent=11 // pred_fallthru
          _
      $region12: #{tpu_custom_call.1} parent=5 // pred_fallthru
        _
      %p191 = scmp.lt.s32.totalorder %s15, 2
      // Predicated region
      $region25: #{tpu_custom_call.1} parent=5 // pred_check
        %p192 = pneg %p191
      $region26: #{tpu_custom_call.1} parent=5 // pred_check_branch
        %194 = sbr.rel (%p192) target = $region28
      $region27: #{tpu_custom_call.1} parent=5 // pred_region
        // Predicated region
        $region29: #{tpu_custom_call.1} parent=27 // pred_check
          %p195 = pneg %p35
        $region30: #{tpu_custom_call.1} parent=27 // pred_check_branch
          %197 = sbr.rel (%p195) target = $region32
        $region31: #{tpu_custom_call.1} parent=27 // pred_region
          %p198 = scmp.lt.s32.totalorder %s15, 1
          %s199 = scalar_select %p198, %s15, 1
          %s200 = smul.addr %s199, 8
          %s201 = scalar_lea.vmem %s0, %s200
        $region32: #{tpu_custom_call.1} parent=27 // pred_fallthru
          _
        // Predicated region
        $region33: #{tpu_custom_call.1} parent=27 // pred_check
          %p202 = pneg %p61
        $region34: #{tpu_custom_call.1} parent=27 // pred_check_branch
          %204 = sbr.rel (%p202) target = $region36
        $region35: #{tpu_custom_call.1} parent=27 // pred_region
          %p205 = scmp.lt.s32.totalorder %s15, 1
          %s206 = scalar_select %p205, %s15, 1
          %s207 = smul.addr %s206, 8
          %s208 = scalar_lea.vmem %s1, %s207
        $region36: #{tpu_custom_call.1} parent=27 // pred_fallthru
          _
      $region28: #{tpu_custom_call.1} parent=5 // pred_fallthru
        _
      %p209 = scmp.le.s32.totalorder 1, %s15
      %p210 = scmp.lt.s32.totalorder %s15, 3
      %p211 = pnand %p209, %p210
      %p212 = pneg %p211
      // Predicated region
      $region37: #{tpu_custom_call.1} parent=5 // pred_check
        _
      $region38: #{tpu_custom_call.1} parent=5 // pred_check_branch
        %214 = sbr.rel (%p211) target = $region40
      $region39: #{tpu_custom_call.1} parent=5 // pred_region
        %s215 = ssub.s32 %s15, 1
        // Predicated region
        $region41: #{tpu_custom_call.1} parent=39 // pred_check
          %p216 = pneg %p88
        $region42: #{tpu_custom_call.1} parent=39 // pred_check_branch
          %218 = sbr.rel (%p216) target = $region44
        $region43: #{tpu_custom_call.1} parent=39 // pred_region
          %220 = dma.done [#allocation3], 512
        $region44: #{tpu_custom_call.1} parent=39 // pred_fallthru
          _
        %p221 = scmp.lt.s32.totalorder %s20, 1
        %s222 = scalar_select %p221, %s20, 1
        %s223 = smul.addr %s222, 8
        %s224 = scalar_lea.vmem %s0, %s223
        %p225 = pneg %p41
        %p226 = pneg %p38
        %p227 = scmp.lt.s32.totalorder %s20, 1
        %s228 = scalar_select %p227, %s20, 1
        %s229 = smul.addr %s228, 8
        %s230 = scalar_lea.vmem %s1, %s229
        %p231 = pneg %p67
        %p232 = pneg %p64
        %p233 = pneg %p88
        %p234 = pneg %p85
        %p235 = pneg %p109
        %p236 = pneg %p106
        %p237 = pneg %p130
        %p238 = pneg %p127
        %p239 = pneg %p156
        %p240 = pneg %p153
        %s241 = sand.u32 %s143, 1
        %s242 = scalar_lea.sflag [#allocation4], %s241
        %s243 = sand.u32 %s143, 1
        %s244 = smul.addr %s243, 8
        %s245 = scalar_lea.vmem [#allocation5], %s244
        %p246 = scmp.lt.s32.totalorder %s20, 1
        %s247 = scalar_select %p246, %s20, 1
        %s248 = smul.addr %s247, 8
        %s249 = scalar_lea.vmem %s0, %s248
        %p250 = scmp.lt.s32.totalorder %s20, 1
        %s251 = scalar_select %p250, %s20, 1
        %s252 = smul.addr %s251, 8
        %s253 = scalar_lea.vmem %s1, %s252
        %v254 = vld [vmem:[%s253] sm:$0xff]
        %v255 = vld [vmem:[%s249] sm:$0xff]
        %v256 = vld [vmem:[#allocation2] sm:$0xff]
        %v257 = vld [vmem:[#allocation2 + $0x8] sm:$0xff]
        %v258 = vld [vmem:[#allocation2 + $0x10] sm:$0xff]
        %v259 = vld [vmem:[#allocation2 + $0x18] sm:$0xff]
        %v260 = vld [vmem:[%s4] sm:$0xf]
        %vm261 = vcmask 31744
        %v263 = vsel %vm261, %v255, 0
        %vm265 = vcmask 1043456
        %v267 = vsel %vm265, %v260, 0
        %269 = vmatpush.msra.mxu0 0.0
        %270 = vmatpush.msra.mxu0 0.0
        %271 = vmatpush.msra.mxu0 0.0
        %272 = vmatpush.msra.mxu0 0.0
        %273 = vmatpush.msra.mxu0 0.0
        %274 = vmatpush.msra.mxu0 0.0
        %275 = vmatpush.msra.mxu0 0.0
        %276 = vmatpush.msra.mxu0 0.0
        %277 = vmatpush.msra.mxu0 0.0
        %278 = vmatpush.msra.mxu0 0.0
        %279 = vmatpush.msra.mxu0 0.0
        %280 = vmatpush.msra.mxu0 0.0
        %281 = vmatpush.msra.mxu0 0.0
        %282 = vmatpush.msra.mxu0 0.0
        %283 = vmatpush.msra.mxu0 0.0
        %284 = vmatpush.msra.mxu0 %v267
        %285 = vmatmul.f32.gmra.mxu0 %v263
        %v286 = vpop.f32.mrf.mxu0
        %v287 = vadd.f32 0.0, %v286
        %288 = vdwg.mxu0
        %v289 = vmul.f32 %v254, %v254
        %290 = vadd.xlane.f32.xlu0 %v289
        %v291 = vpop.xlane.xlu0 %290
        %292 = vmatpush.xpose.msra.mxu0 0.0
        %293 = vmatpush.xpose.msra.mxu0 0.0
        %294 = vmatpush.xpose.msra.mxu0 0.0
        %295 = vmatpush.xpose.msra.mxu0 0.0
        %296 = vmatpush.xpose.msra.mxu0 0.0
        %297 = vmatpush.xpose.msra.mxu0 0.0
        %298 = vmatpush.xpose.msra.mxu0 0.0
        %299 = vmatpush.xpose.msra.mxu0 0.0
        %300 = vmatpush.xpose.msra.mxu0 0.0
        %301 = vmatpush.xpose.msra.mxu0 0.0
        %302 = vmatpush.xpose.msra.mxu0 0.0
        %303 = vmatpush.xpose.msra.mxu0 0.0
        %304 = vmatpush.xpose.msra.mxu0 %v259
        %305 = vmatpush.xpose.msra.mxu0 %v258
        %306 = vmatpush.xpose.msra.mxu0 %v257
        %307 = vmatpush.xpose.msra.mxu0 %v256
        %308 = vmatmul.f32.gmra.mxu0 %v254
        %v309 = vpop.f32.mrf.mxu0
        %v310 = vadd.f32 0.0, %v309
        %311 = vdwg.mxu0
        %v312 = vmul.f32 %v310, 2.0
        %v313 = vsub.f32 %v291, %v312
        %v314 = vld [vmem:[%s3] sm:$0x1]
        %v316 = vperm.slane %v314, 0
        %v318 = vadd.f32 %v313, %v316
        %v319 = vmul.f32 %v318, -0.0078125
        %v320 = vmul.f32 %v319, 1.442695
        %v321 = vpow.pop %v320
        %v322 = vmul.f32 %v287, %v321
        %vm323 = vcmask 261120
        %v324 = vsel %vm323, %v322, 0.0
        %325 = vadd.xlane.f32.xlu0 %v324
        %v326 = vpop.xlane.xlu0 %325
        %v327 = vmul.f32 %v326, %v254
        %v329 = vsel %vm323, %v322, 0
        %331 = vmatpush.msra.mxu0 0.0
        %332 = vmatpush.msra.mxu0 0.0
        %333 = vmatpush.msra.mxu0 0.0
        %334 = vmatpush.msra.mxu0 0.0
        %335 = vmatpush.msra.mxu0 0.0
        %336 = vmatpush.msra.mxu0 0.0
        %337 = vmatpush.msra.mxu0 0.0
        %338 = vmatpush.msra.mxu0 0.0
        %339 = vmatpush.msra.mxu0 0.0
        %340 = vmatpush.msra.mxu0 0.0
        %341 = vmatpush.msra.mxu0 0.0
        %342 = vmatpush.msra.mxu0 0.0
        %343 = vmatpush.msra.mxu0 %v259
        %344 = vmatpush.msra.mxu0 %v258
        %345 = vmatpush.msra.mxu0 %v257
        %346 = vmatpush.msra.mxu0 %v256
        %347 = vmatmul.f32.gmra.mxu0 %v329
        %v348 = vpop.f32.mrf.mxu0
        %v349 = vadd.f32 0.0, %v348
        %350 = vdwg.mxu0
        %v351 = vsub.f32 %v327, %v349
        %v352 = vmul.f32 %v351, %v351
        %353 = vadd.xlane.f32.xlu0 %v352
        %v354 = vpop.xlane.xlu0 %353
        %v355 = vrsqrt.pop %v354
        %v356 = vmul.f32 %v355, %v354
        %v357 = vmul.f32 %v356, %v355
        %v358 = vmul.f32 0.5, %v357
        %v359 = vsub.f32 1.5, %v358
        %v360 = vmul.f32 %v355, %v359
        %vm361 = vweird.f32 %v354
        %vm362 = vweird.f32 %v355
        %vm363 = vmor %vm361, %vm362
        %v364 = vsel %vm363, %v355, %v360
        %v365 = vmul.f32 %v351, %v364
        %366 = vst [vmem:[%s245] sm:$0xff] %v365
        %s367 = sand.u32 %s143, 1
        %s368 = scalar_lea.sflag [#allocation4], %s367
        %s369 = sand.u32 %s143, 1
        %s370 = smul.addr %s369, 8
        %s371 = scalar_lea.vmem [#allocation5], %s370
        // Predicated region
        $region45: #{tpu_custom_call.1} parent=39 // pred_check
          %p372 = pneg %p153
        $region46: #{tpu_custom_call.1} parent=39 // pred_check_branch
          %374 = sbr.rel (%p372) target = $region48
        $region47: #{tpu_custom_call.1} parent=39 // pred_region
          %376 = vsyncadd %s368, 0
          %s377 = smul.addr %s20, 8
          %s378 = scalar_lea.hbm %s5, %s377
          %s380 = sshll.u32 %s371, 4
          %s381 = int_to_ptr.vmem [resolvable:$true] %s380
          %s382 = sshll.u32 %s378, 4
          %s383 = int_to_ptr.hbm [resolvable:$true] %s382
          %385 = dma.vmem_to_hbm [thread:$0]  %s381, 128, %s383, %s368
        $region48: #{tpu_custom_call.1} parent=39 // pred_fallthru
          _
      $region40: #{tpu_custom_call.1} parent=5 // pred_fallthru
        _
      %p386 = scmp.le.s32.totalorder 2, %s15
      // Predicated region
      $region49: #{tpu_custom_call.1} parent=5 // pred_check
        %p387 = pneg %p386
      $region50: #{tpu_custom_call.1} parent=5 // pred_check_branch
        %389 = sbr.rel (%p387) target = $region52
      $region51: #{tpu_custom_call.1} parent=5 // pred_region
        %s390 = ssub.s32 %s15, 2
        // Predicated region
        $region53: #{tpu_custom_call.1} parent=51 // pred_check
          %p391 = pneg %p159
        $region54: #{tpu_custom_call.1} parent=51 // pred_check_branch
          %393 = sbr.rel (%p391) target = $region56
        $region55: #{tpu_custom_call.1} parent=51 // pred_region
          %s394 = sand.u32 %s144, 1
          %s395 = scalar_lea.sflag [#allocation4], %s394
          %s396 = sand.u32 %s144, 1
          %s397 = smul.addr %s396, 8
          %s398 = scalar_lea.vmem [#allocation5], %s397
          %400 = dma.done %s395, 128
        $region56: #{tpu_custom_call.1} parent=51 // pred_fallthru
          _
      $region52: #{tpu_custom_call.1} parent=5 // pred_fallthru
        _
    $region6: #{tpu_custom_call.1} parent=1 // loop_footer
      %s19 = sadd.s32 1, %s15
    $region7: #{tpu_custom_call.1} parent=1 // loop_footer_branch
      %14 = sbr.rel target = $region3
    $region8: #{tpu_custom_call.1} parent=1 // loop_exit
      _
    %401 = vsyncpa [#allocation3], 1
    %s402 = scalar_lea.sflag [#allocation3], 1
    %403 = vsyncpa %s402, 1
    %404 = vsyncpa [#allocation4], 1
    %s405 = scalar_lea.sflag [#allocation4], 1
    %406 = vsyncpa %s405, 1

</llo_original>
